<compile_context>
chip_gen: v7x
topology: tpu7x:2x2x1
jax: 0.10.0
libtpu: 0.0.40
codegen_flags: <defaults>
</compile_context>

<pallas_src>
import jax
import jax.numpy as jnp
from jax.experimental import pallas as pl
from jax.experimental.pallas import tpu as pltpu


def attention_pooling_kernel(x_ref, wk_t_ref, bk_ref, q_ref, wf_t_ref, bf_ref, o_ref):
    TB, N, D = x_ref.shape

    x = x_ref[...].astype(jnp.float32)            # (TB, N, D)
    x2 = x.reshape(TB * N, D)                     # (TB*N, D) -- fill MXU rows

    # keys = x @ Wk^T + bk  -> (TB*N, H)   (wk_t is pre-transposed: (D, H))
    keys = (
        jnp.dot(x2, wk_t_ref[...], preferred_element_type=jnp.float32)
        + bk_ref[...]
    )

    # scores = keys @ q  -> done as a VPU broadcast-multiply + lane reduce
    # (q is passed as a (1, H) row; avoids a 1-column MXU matmul).
    scores = jnp.sum(keys * q_ref[...], axis=-1, keepdims=True)   # (TB*N, 1)
    scores = scores.reshape(TB, N, 1)

    # softmax over the instance axis (dim=1 of the (B, N, 1) tensor)
    m = jnp.max(scores, axis=1, keepdims=True)                    # (TB, 1, 1)
    e = jnp.exp(scores - m)                                       # (TB, N, 1)
    denom = jnp.sum(e, axis=1, keepdims=True)                     # (TB, 1, 1)
    attn = e * pl.reciprocal(denom, approx=True)                  # (TB, N, 1)

    # pooled = attn^T @ x  -> broadcast-multiply + sublane reduce over N
    pooled = jnp.sum(attn * x, axis=1)                            # (TB, D)

    # final linear for the whole tile: (TB, D) @ (D, O) + bf -> (TB, O)
    out = (
        jnp.dot(pooled, wf_t_ref[...], preferred_element_type=jnp.float32)
        + bf_ref[...]
    )

    o_ref[...] = out.astype(o_ref.dtype)


def _choose_tb(B, N, target_rows=512):
    """Largest divisor of B such that TB*N keeps the keys matmul a reasonable
    tile (~target_rows rows), preferring TB == B or TB % 8 == 0 so the output
    block shape stays friendly to TPU block constraints."""
    best = 1
    for tb in range(1, B + 1):
        if B % tb:
            continue
        if tb * N > max(target_rows, N):
            continue
        if tb == B or tb % 8 == 0 or tb == 1:
            best = max(best, tb)
    return best


def attention_pooling(x, wk, bk, q, wf, bf, *, tb=None):
    """x: (B, N, D); wk: (H, D); bk: (H,); q: (H, 1); wf: (O, D); bf: (O,)."""
    B, N, D = x.shape
    H = wk.shape[0]
    O = wf.shape[0]

    if tb is None:
        tb = _choose_tb(B, N)
    assert B % tb == 0, "tile size must divide the batch"

    # Pre-transpose grid-invariant weights once on the host side.
    wk_t = wk.T          # (D, H)
    wf_t = wf.T          # (D, O)
    bk2 = bk.reshape(1, H)
    q_row = q.reshape(1, H)
    bf2 = bf.reshape(1, O)

    # NOTE: weight tiles here are tiny; if D/H grow large (v7x has 64 MiB VMEM),
    # cap `tb`, set vmem_limit_bytes explicitly, and consider
    # pipeline_mode=pl.Buffered(1) on the grid-invariant weight specs.
    return pl.pallas_call(
        attention_pooling_kernel,
        out_shape=jax.ShapeDtypeStruct((B, O), x.dtype),
        grid=(B // tb,),
        in_specs=[
            pl.BlockSpec((tb, N, D), lambda b: (b, 0, 0)),  # x: TB bags / step
            pl.BlockSpec((D, H), lambda b: (0, 0)),         # key weight^T (full)
            pl.BlockSpec((1, H), lambda b: (0, 0)),         # key bias
            pl.BlockSpec((1, H), lambda b: (0, 0)),         # query (row layout)
            pl.BlockSpec((D, O), lambda b: (0, 0)),         # fc weight^T (full)
            pl.BlockSpec((1, O), lambda b: (0, 0)),         # fc bias
        ],
        out_specs=pl.BlockSpec((tb, O), lambda b: (b, 0)),
        compiler_params=pltpu.CompilerParams(
            dimension_semantics=("parallel",)
        ),
    )(x, wk_t, bk2, q_row, wf_t, bf2)


def attention_pooling_ref(x, wk, bk, q, wf, bf):
    keys = jnp.einsum("bnd,hd->bnh", x, wk) + bk            # (B, N, H)
    scores = jnp.einsum("bnh,ho->bno", keys, q)             # (B, N, 1)
    attn = jax.nn.softmax(scores, axis=1)                   # softmax over N
    pooled = jnp.einsum("bno,bnd->bod", attn, x)[:, 0, :]   # (B, D)
    return pooled @ wf.T + bf                               # (B, O)


if __name__ == "__main__":
    # Small shapes consistent with the module's forward.
    B, N, D, H, O = 2, 8, 32, 32, 2

    key = jax.random.PRNGKey(0)
    kx, kwk, kbk, kq, kwf, kbf = jax.random.split(key, 6)

    x = jax.random.normal(kx, (B, N, D), dtype=jnp.float32)

    # Deterministic synthetic parameters (shapes from __init__).
    wk = jax.random.normal(kwk, (H, D), dtype=jnp.float32) * 0.1   # key.weight
    bk = jax.random.normal(kbk, (H,), dtype=jnp.float32) * 0.1     # key.bias
    q = jax.random.normal(kq, (H, 1), dtype=jnp.float32)           # query
    wf = jax.random.normal(kwf, (O, D), dtype=jnp.float32) * 0.1   # fc.weight
    bf = jax.random.normal(kbf, (O,), dtype=jnp.float32) * 0.1     # fc.bias

    out = attention_pooling(x, wk, bk, q, wf, bf)
    out = jax.block_until_ready(out)

    ref = attention_pooling_ref(x, wk, bk, q, wf, bf)
    assert out.shape == (B, O)
    # Slightly relaxed tolerance: softmax normalizer uses the EUP approximate
    # reciprocal (pl.reciprocal(approx=True)).
    assert jnp.allclose(out, ref, atol=1e-3, rtol=1e-3), (out, ref)

    print("KERNEL_OK")
</pallas_src>

<mosaic_0001>
module attributes {stable_mosaic.version = 11 : i64} {
  func.func @attention_pooling_kernel(%arg0: i32, %arg1: memref<2x8x32xf32, #tpu.memory_space<vmem>>, %arg2: memref<32x32xf32, #tpu.memory_space<vmem>>, %arg3: memref<1x32xf32, #tpu.memory_space<vmem>>, %arg4: memref<1x32xf32, #tpu.memory_space<vmem>>, %arg5: memref<32x2xf32, #tpu.memory_space<vmem>>, %arg6: memref<1x2xf32, #tpu.memory_space<vmem>>, %arg7: memref<2x2xf32, #tpu.memory_space<vmem>>) attributes {dimension_semantics = [#tpu.dimension_semantics<parallel>], iteration_bounds = array<i64: 1>, scalar_prefetch = 0 : i64, scratch_operands = 0 : i64, tpu.core_type = #tpu.core_type<tc>, window_params = [{transform_indices = @transform_0, window_bounds = array<i64: 2, 8, 32>}, {pipeline_mode = #tpu.pipeline_mode<synchronous>, transform_indices = @transform_1, window_bounds = array<i64: 32, 32>}, {pipeline_mode = #tpu.pipeline_mode<synchronous>, transform_indices = @transform_2, window_bounds = array<i64: 1, 32>}, {pipeline_mode = #tpu.pipeline_mode<synchronous>, transform_indices = @transform_3, window_bounds = array<i64: 1, 32>}, {pipeline_mode = #tpu.pipeline_mode<synchronous>, transform_indices = @transform_4, window_bounds = array<i64: 32, 2>}, {pipeline_mode = #tpu.pipeline_mode<synchronous>, transform_indices = @transform_5, window_bounds = array<i64: 1, 2>}, {transform_indices = @transform_6, window_bounds = array<i64: 2, 2>}]} {
    %c0 = arith.constant 0 : index
    %c0_0 = arith.constant 0 : index
    %c0_1 = arith.constant 0 : index
    %0 = vector.load %arg1[%c0, %c0_0, %c0_1] : memref<2x8x32xf32, #tpu.memory_space<vmem>>, vector<2x8x32xf32>
    %1 = vector.shape_cast %0 : vector<2x8x32xf32> to vector<16x32xf32>
    %c0_2 = arith.constant 0 : index
    %c0_3 = arith.constant 0 : index
    %2 = vector.load %arg2[%c0_2, %c0_3] : memref<32x32xf32, #tpu.memory_space<vmem>>, vector<32x32xf32>
    %cst = arith.constant dense<0.000000e+00> : vector<16x32xf32>
    %3 = tpu.matmul %1, %2, %cst {dimension_numbers = #tpu.dot_dimension_numbers<[1], [0], [0], [1], [0, 0, 1, 1], [], []>} : vector<16x32xf32>, vector<32x32xf32>, vector<16x32xf32> -> vector<16x32xf32>
    %c0_4 = arith.constant 0 : index
    %c0_5 = arith.constant 0 : index
    %4 = vector.load %arg3[%c0_4, %c0_5] : memref<1x32xf32, #tpu.memory_space<vmem>>, vector<1x32xf32>
    %5 = vector.broadcast %4 : vector<1x32xf32> to vector<16x32xf32>
    %6 = arith.addf %3, %5 : vector<16x32xf32>
    %c0_6 = arith.constant 0 : index
    %c0_7 = arith.constant 0 : index
    %7 = vector.load %arg4[%c0_6, %c0_7] : memref<1x32xf32, #tpu.memory_space<vmem>>, vector<1x32xf32>
    %8 = vector.broadcast %7 : vector<1x32xf32> to vector<16x32xf32>
    %9 = arith.mulf %6, %8 : vector<16x32xf32>
    %cst_8 = arith.constant dense<0.000000e+00> : vector<16xf32>
    %10 = vector.multi_reduction <add>, %9, %cst_8 [1] : vector<16x32xf32> to vector<16xf32>
    %11 = vector.shape_cast %10 : vector<16xf32> to vector<16x1xf32>
    %12 = vector.shape_cast %11 : vector<16x1xf32> to vector<2x8x1xf32>
    %cst_9 = arith.constant dense<0xFF800000> : vector<2x1xf32>
    %13 = vector.multi_reduction <maximumf>, %12, %cst_9 [1] : vector<2x8x1xf32> to vector<2x1xf32>
    %14 = vector.shape_cast %13 : vector<2x1xf32> to vector<2x1x1xf32>
    %15 = vector.broadcast %14 : vector<2x1x1xf32> to vector<2x8x1xf32>
    %16 = arith.subf %12, %15 : vector<2x8x1xf32>
    %17 = math.exp %16 : vector<2x8x1xf32>
    %cst_10 = arith.constant dense<0.000000e+00> : vector<2x1xf32>
    %18 = vector.multi_reduction <add>, %17, %cst_10 [1] : vector<2x8x1xf32> to vector<2x1xf32>
    %19 = vector.shape_cast %18 : vector<2x1xf32> to vector<2x1x1xf32>
    %20 = tpu.reciprocal %19 {approx = true} : vector<2x1x1xf32> -> vector<2x1x1xf32>
    %21 = vector.broadcast %20 : vector<2x1x1xf32> to vector<2x8x1xf32>
    %22 = arith.mulf %17, %21 : vector<2x8x1xf32>
    %23 = vector.broadcast %22 : vector<2x8x1xf32> to vector<2x8x32xf32>
    %24 = arith.mulf %23, %0 : vector<2x8x32xf32>
    %cst_11 = arith.constant dense<0.000000e+00> : vector<2x32xf32>
    %25 = vector.multi_reduction <add>, %24, %cst_11 [1] : vector<2x8x32xf32> to vector<2x32xf32>
    %c0_12 = arith.constant 0 : index
    %c0_13 = arith.constant 0 : index
    %26 = vector.load %arg5[%c0_12, %c0_13] : memref<32x2xf32, #tpu.memory_space<vmem>>, vector<32x2xf32>
    %cst_14 = arith.constant dense<0.000000e+00> : vector<2x2xf32>
    %27 = tpu.matmul %25, %26, %cst_14 {dimension_numbers = #tpu.dot_dimension_numbers<[1], [0], [0], [1], [0, 0, 1, 1], [], []>} : vector<2x32xf32>, vector<32x2xf32>, vector<2x2xf32> -> vector<2x2xf32>
    %c0_15 = arith.constant 0 : index
    %c0_16 = arith.constant 0 : index
    %28 = vector.load %arg6[%c0_15, %c0_16] : memref<1x2xf32, #tpu.memory_space<vmem>>, vector<1x2xf32>
    %29 = vector.broadcast %28 : vector<1x2xf32> to vector<2x2xf32>
    %30 = arith.addf %27, %29 : vector<2x2xf32>
    %c0_17 = arith.constant 0 : index
    %c0_18 = arith.constant 0 : index
    %31 = vector.load %arg7[%c0_17, %c0_18] : memref<2x2xf32, #tpu.memory_space<vmem>>, vector<2x2xf32>
    tpu.vector_store %arg7[%c0_17, %c0_18], %30 {strides = array<i32>} : memref<2x2xf32, #tpu.memory_space<vmem>>, vector<2x2xf32>,
    return
  }
  func.func @transform_0(%arg0: i32) -> (i32, i32, i32) {
    %c0_i32 = arith.constant 0 : i32
    %c0_i32_0 = arith.constant 0 : i32
    %c0_i32_1 = arith.constant 0 : i32
    return %arg0, %c0_i32, %c0_i32_0 : i32, i32, i32
  }
  func.func @transform_1(%arg0: i32) -> (i32, i32) {
    %c0_i32 = arith.constant 0 : i32
    %c0_i32_0 = arith.constant 0 : i32
    %c0_i32_1 = arith.constant 0 : i32
    return %c0_i32, %c0_i32_0 : i32, i32
  }
  func.func @transform_2(%arg0: i32) -> (i32, i32) {
    %c0_i32 = arith.constant 0 : i32
    %c0_i32_0 = arith.constant 0 : i32
    %c0_i32_1 = arith.constant 0 : i32
    return %c0_i32, %c0_i32_0 : i32, i32
  }
  func.func @transform_3(%arg0: i32) -> (i32, i32) {
    %c0_i32 = arith.constant 0 : i32
    %c0_i32_0 = arith.constant 0 : i32
    %c0_i32_1 = arith.constant 0 : i32
    return %c0_i32, %c0_i32_0 : i32, i32
  }
  func.func @transform_4(%arg0: i32) -> (i32, i32) {
    %c0_i32 = arith.constant 0 : i32
    %c0_i32_0 = arith.constant 0 : i32
    %c0_i32_1 = arith.constant 0 : i32
    return %c0_i32, %c0_i32_0 : i32, i32
  }
  func.func @transform_5(%arg0: i32) -> (i32, i32) {
    %c0_i32 = arith.constant 0 : i32
    %c0_i32_0 = arith.constant 0 : i32
    %c0_i32_1 = arith.constant 0 : i32
    return %c0_i32, %c0_i32_0 : i32, i32
  }
  func.func @transform_6(%arg0: i32) -> (i32, i32) {
    %c0_i32 = arith.constant 0 : i32
    %c0_i32_0 = arith.constant 0 : i32
    return %arg0, %c0_i32 : i32, i32
  }
}

</mosaic_0001>

<llo_original>
// kernel: tpu_custom_call.1
$region0: #{tpu_custom_call.1}
  #allocation0 [shape = 'u32[]', space=smem, size = 0x4, offset = 0x4, fixed_abs, tag = 'smem constant byte address 0x4 - core index']
  #allocation1 [shape = 'u32[144,128]{1,0:T(1,128)}', space=vmem, size = 0x12000, scoped, tag = 'internal scratch']
  %s0 = inlined_call_operand.hbm [shape: f32[2,8,32], index: 0, kind: input, shape index: {}]
  %s1 = inlined_call_operand.vmem [shape: f32[32,32], index: 1, kind: input, shape index: {}]
  %s2 = inlined_call_operand.vmem [shape: f32[1,32], index: 2, kind: input, shape index: {}]
  %s3 = inlined_call_operand.vmem [shape: f32[1,32], index: 3, kind: input, shape index: {}]
  %s4 = inlined_call_operand.vmem [shape: f32[32,2], index: 4, kind: input, shape index: {}]
  %s5 = inlined_call_operand.vmem [shape: f32[1,2], index: 5, kind: input, shape index: {}]
  %s6 = inlined_call_operand.hbm [shape: f32[2,2], index: 6, kind: output, shape index: {}]
  %s7 = sld [smem:[#allocation0]]
  $region38: #{tpu_custom_call.1} parent=0
    _
  %s9 = ssub.s32 1, %s7
  %s10 = scalar_select 0, %s9, %s7
  $region1: #{tpu_custom_call.1} parent=0
    #allocation2 [shape = 'u8[8192]{0}', space=vmem, size = 0x2000, scoped, tag = 'input window, operand 0, single buffered']
    #allocation3 [shape = 's32[1]{0}', space=sflag, size = 0x4, scoped, tag = 'scoped memory for tpu_custom_call.1']
    #allocation4 [shape = 's32[1]{0}', space=sflag, size = 0x4, scoped, tag = 'scoped memory for tpu_custom_call.1']
    #allocation5 [shape = 'u8[1024]{0}', space=vmem, size = 0x400, scoped, tag = 'output window, operand 0, single buffered']
    %11 = vsyncpa [#allocation3], 0
    %12 = vsyncpa [#allocation4], 0
    // Predicated region
    $region2: #{tpu_custom_call.1} parent=1 // pred_check
      _
    $region3: #{tpu_custom_call.1} parent=1 // pred_check_branch
      %14 = sbr.rel (0) target = $region5
    $region4: #{tpu_custom_call.1} parent=1 // pred_region
      %s16 = ssub.s32 256, 256
      %17 = vsyncadd [#allocation3], %s16
      %s18 = sshll.u32 [#allocation2], 4
      %s19 = int_to_ptr.vmem [resolvable:$true] %s18
      %24 = dma.hbm_to_vmem [thread:$0]  %s0, 256, %s19, [#allocation3], 128, 128, 8
    $region5: #{tpu_custom_call.1} parent=1 // pred_fallthru
      _
    // Predicated region
    $region6: #{tpu_custom_call.1} parent=1 // pred_check
      _
    $region7: #{tpu_custom_call.1} parent=1 // pred_check_branch
      %26 = sbr.rel (0) target = $region9
    $region8: #{tpu_custom_call.1} parent=1 // pred_region
      _
    $region9: #{tpu_custom_call.1} parent=1 // pred_fallthru
      _
    // Predicated region
    $region10: #{tpu_custom_call.1} parent=1 // pred_check
      _
    $region11: #{tpu_custom_call.1} parent=1 // pred_check_branch
      %28 = sbr.rel (0) target = $region13
    $region12: #{tpu_custom_call.1} parent=1 // pred_region
      _
    $region13: #{tpu_custom_call.1} parent=1 // pred_fallthru
      _
    // Predicated region
    $region14: #{tpu_custom_call.1} parent=1 // pred_check
      _
    $region15: #{tpu_custom_call.1} parent=1 // pred_check_branch
      %30 = sbr.rel (0) target = $region17
    $region16: #{tpu_custom_call.1} parent=1 // pred_region
      _
    $region17: #{tpu_custom_call.1} parent=1 // pred_fallthru
      _
    // Predicated region
    $region18: #{tpu_custom_call.1} parent=1 // pred_check
      _
    $region19: #{tpu_custom_call.1} parent=1 // pred_check_branch
      %32 = sbr.rel (0) target = $region21
    $region20: #{tpu_custom_call.1} parent=1 // pred_region
      _
    $region21: #{tpu_custom_call.1} parent=1 // pred_fallthru
      _
    // Predicated region
    $region22: #{tpu_custom_call.1} parent=1 // pred_check
      _
    $region23: #{tpu_custom_call.1} parent=1 // pred_check_branch
      %34 = sbr.rel (0) target = $region25
    $region24: #{tpu_custom_call.1} parent=1 // pred_region
      _
    $region25: #{tpu_custom_call.1} parent=1 // pred_fallthru
      _
    // Predicated region
    $region26: #{tpu_custom_call.1} parent=1 // pred_check
      _
    $region27: #{tpu_custom_call.1} parent=1 // pred_check_branch
      %36 = sbr.rel (0) target = $region29
    $region28: #{tpu_custom_call.1} parent=1 // pred_region
      %37 = dma.done [#allocation3], 256
    $region29: #{tpu_custom_call.1} parent=1 // pred_fallthru
      _
    %v38 = vld [vmem:[#allocation2] sm:$0xff]
    %v39 = vld [vmem:[#allocation2 + $0x8] sm:$0xff]
    %v40 = vld [vmem:[%s1] sm:$0xff]
    %v41 = vld [vmem:[%s1 + $0x8] sm:$0xff]
    %v42 = vld [vmem:[%s1 + $0x10] sm:$0xff]
    %v43 = vld [vmem:[%s1 + $0x18] sm:$0xff]
    %v44 = vld [vmem:[%s2] sm:$0x1]
    %v46 = vlaneseq
    %v47 = vshrl.u32 %v46, 7
    %v48 = vsub.s32 0, %v47
    %v49 = vrot.slane %v44, %v48
    %vm51 = vcmask 261120
    %v53 = vsel %vm51, %v38, 0
    %v56 = vsel %vm51, %v39, 0
    %58 = vmatprep.subr.mxu0 0.0
    %59 = vmatpush1.msra.mxu0 %v40
    %60 = vmatprep.subr.mxu0 0.0
    %61 = vmatpush1.msra.mxu0 %v41
    %62 = vmatprep.subr.mxu0 0.0
    %63 = vmatpush1.msra.mxu0 %v42
    %64 = vmatprep.subr.mxu0 0.0
    %65 = vmatpush1.msra.mxu0 %v43
    %66 = vmatprep.subr.mxu0 0.0
    %67 = vmatpush1.msra.mxu0 0.0
    %68 = vmatprep.subr.mxu0 0.0
    %69 = vmatpush1.msra.mxu0 0.0
    %70 = vmatprep.subr.mxu0 0.0
    %71 = vmatpush1.msra.mxu0 0.0
    %72 = vmatprep.subr.mxu0 0.0
    %73 = vmatpush1.msra.mxu0 0.0
    %74 = vmatprep.subr.mxu0 0.0
    %75 = vmatpush1.msra.mxu0 0.0
    %76 = vmatprep.subr.mxu0 0.0
    %77 = vmatpush1.msra.mxu0 0.0
    %78 = vmatprep.subr.mxu0 0.0
    %79 = vmatpush1.msra.mxu0 0.0
    %80 = vmatprep.subr.mxu0 0.0
    %81 = vmatpush1.msra.mxu0 0.0
    %82 = vmatprep.subr.mxu0 0.0
    %83 = vmatpush1.msra.mxu0 0.0
    %84 = vmatprep.subr.mxu0 0.0
    %85 = vmatpush1.msra.mxu0 0.0
    %86 = vmatprep.subr.mxu0 0.0
    %87 = vmatpush1.msra.mxu0 0.0
    %88 = vmatprep.subr.mxu0 0.0
    %89 = vmatpush1.msra.mxu0 0.0
    %90 = vmatprep.subr.mxu0 0.0
    %91 = vmatpush1.msra.mxu0 0.0
    %92 = vmatprep.subr.mxu0 0.0
    %93 = vmatpush1.msra.mxu0 0.0
    %94 = vmatprep.subr.mxu0 0.0
    %95 = vmatpush1.msra.mxu0 0.0
    %96 = vmatprep.subr.mxu0 0.0
    %97 = vmatpush1.msra.mxu0 0.0
    %98 = vmatprep.subr.mxu0 0.0
    %99 = vmatpush1.msra.mxu0 0.0
    %100 = vmatprep.subr.mxu0 0.0
    %101 = vmatpush1.msra.mxu0 0.0
    %102 = vmatprep.subr.mxu0 0.0
    %103 = vmatpush1.msra.mxu0 0.0
    %104 = vmatprep.subr.mxu0 0.0
    %105 = vmatpush1.msra.mxu0 0.0
    %106 = vmatprep.subr.mxu0 0.0
    %107 = vmatpush1.msra.mxu0 0.0
    %108 = vmatprep.subr.mxu0 0.0
    %109 = vmatpush1.msra.mxu0 0.0
    %110 = vmatprep.subr.mxu0 0.0
    %111 = vmatpush1.msra.mxu0 0.0
    %112 = vmatprep.subr.mxu0 0.0
    %113 = vmatpush1.msra.mxu0 0.0
    %114 = vmatprep.subr.mxu0 0.0
    %115 = vmatpush1.msra.mxu0 0.0
    %116 = vmatprep.subr.mxu0 0.0
    %117 = vmatpush1.msra.mxu0 0.0
    %118 = vmatprep.subr.mxu0 0.0
    %119 = vmatpush1.msra.mxu0 0.0
    %120 = vmatprep.subr.mxu0 0.0
    %121 = vmatpush1.msra.mxu0 0.0
    %122 = vmatprep.mubr.f32.mxu0 0.0
    %123 = vmatmul.mubr.f32.gmra.mrb[0].mxu0 %v53
    %v124 = vpop.f32.mrb[0].mxu0
    %v125 = vadd.f32 %v49, %v124
    %v126 = vpop.f32.mrb[0].mxu0
    %127 = vmatprep.mubr.f32.mxu0 0.0
    %128 = vmatmul.mubr.f32.gmra.mrb[0].mxu0 %v56
    %v129 = vpop.f32.mrb[0].mxu0
    %v130 = vadd.f32 %v49, %v129
    %v131 = vpop.f32.mrb[0].mxu0
    %132 = vdwg.mxu0
    %v133 = vld [vmem:[%s3] sm:$0x1]
    %v135 = vlaneseq
    %v136 = vshrl.u32 %v135, 7
    %v137 = vsub.s32 0, %v136
    %v138 = vrot.slane %v133, %v137
    %v140 = vmul.f32 %v125, %v138
    %v141 = vmul.f32 %v130, %v138
    %v142 = vsel %vm51, %v140, 0.0
    %143 = vadd.xlane.f32.xlu0 %v142
    %v144 = vpop.xlane.xlu0 %143
    %v145 = vsel %vm51, %v141, 0.0
    %146 = vadd.xlane.f32.xlu0 %v145
    %v147 = vpop.xlane.xlu0 %146
    %v148 = vrot.slane %v144, 4
    %v149 = vmax.f32 %v144, %v148
    %v150 = vrot.slane %v149, 2
    %v151 = vmax.f32 %v149, %v150
    %v152 = vrot.slane %v151, 1
    %v153 = vmax.f32 %v151, %v152
    %v154 = vrot.slane %v147, 4
    %v155 = vmax.f32 %v147, %v154
    %v156 = vrot.slane %v155, 2
    %v157 = vmax.f32 %v155, %v156
    %v158 = vrot.slane %v157, 1
    %v159 = vmax.f32 %v157, %v158
    %v160 = vsub.f32 %v144, %v153
    %v161 = vsub.f32 %v147, %v159
    %v162 = vmul.f32 %v160, 1.442695
    %v163 = vpow.pop %v162
    %v164 = vmul.f32 %v161, 1.442695
    %v165 = vpow.pop %v164
    %v166 = vrot.slane %v163, 4
    %v167 = vadd.f32 %v163, %v166
    %v168 = vrot.slane %v167, 2
    %v169 = vadd.f32 %v167, %v168
    %v170 = vrot.slane %v169, 1
    %v171 = vadd.f32 %v169, %v170
    %v172 = vrot.slane %v165, 4
    %v173 = vadd.f32 %v165, %v172
    %v174 = vrot.slane %v173, 2
    %v175 = vadd.f32 %v173, %v174
    %v176 = vrot.slane %v175, 1
    %v177 = vadd.f32 %v175, %v176
    %v178 = vrcp.pop %v171
    %v179 = vrcp.pop %v177
    %v180 = vmul.f32 %v163, %v178
    %v181 = vmul.f32 %v165, %v179
    %v182 = vmul.f32 %v180, %v38
    %v183 = vmul.f32 %v181, %v39
    %v184 = vsel %vm51, %v182, 0.0
    %v185 = vrot.slane %v184, 4
    %v186 = vadd.f32 %v184, %v185
    %v187 = vrot.slane %v186, 2
    %v188 = vadd.f32 %v186, %v187
    %v189 = vrot.slane %v188, 1
    %v190 = vadd.f32 %v188, %v189
    %v191 = vsel %vm51, %v183, 0.0
    %v192 = vrot.slane %v191, 4
    %v193 = vadd.f32 %v191, %v192
    %v194 = vrot.slane %v193, 2
    %v195 = vadd.f32 %v193, %v194
    %v196 = vrot.slane %v195, 1
    %v197 = vadd.f32 %v195, %v196
    %v198 = vld [vmem:[%s4] sm:$0xff]
    %v199 = vld [vmem:[%s4 + $0x8] sm:$0xff]
    %v200 = vld [vmem:[%s4 + $0x10] sm:$0xff]
    %v201 = vld [vmem:[%s4 + $0x18] sm:$0xff]
    %v202 = vld [vmem:[%s5] sm:$0x1]
    %v204 = vlaneseq
    %v205 = vshrl.u32 %v204, 7
    %v206 = vsub.s32 0, %v205
    %v207 = vrot.slane %v202, %v206
    %vm211 = vcmask 1041409
    %v212 = vsel %vm211, %v197, %v190
    %v213 = vsel %vm51, %v212, 0
    %215 = vmatprep.subr.mxu0 0.0
    %216 = vmatpush1.msra.mxu0 %v198
    %217 = vmatprep.subr.mxu0 0.0
    %218 = vmatpush1.msra.mxu0 %v199
    %219 = vmatprep.subr.mxu0 0.0
    %220 = vmatpush1.msra.mxu0 %v200
    %221 = vmatprep.subr.mxu0 0.0
    %222 = vmatpush1.msra.mxu0 %v201
    %223 = vmatprep.subr.mxu0 0.0
    %224 = vmatpush1.msra.mxu0 0.0
    %225 = vmatprep.subr.mxu0 0.0
    %226 = vmatpush1.msra.mxu0 0.0
    %227 = vmatprep.subr.mxu0 0.0
    %228 = vmatpush1.msra.mxu0 0.0
    %229 = vmatprep.subr.mxu0 0.0
    %230 = vmatpush1.msra.mxu0 0.0
    %231 = vmatprep.subr.mxu0 0.0
    %232 = vmatpush1.msra.mxu0 0.0
    %233 = vmatprep.subr.mxu0 0.0
    %234 = vmatpush1.msra.mxu0 0.0
    %235 = vmatprep.subr.mxu0 0.0
    %236 = vmatpush1.msra.mxu0 0.0
    %237 = vmatprep.subr.mxu0 0.0
    %238 = vmatpush1.msra.mxu0 0.0
    %239 = vmatprep.subr.mxu0 0.0
    %240 = vmatpush1.msra.mxu0 0.0
    %241 = vmatprep.subr.mxu0 0.0
    %242 = vmatpush1.msra.mxu0 0.0
    %243 = vmatprep.subr.mxu0 0.0
    %244 = vmatpush1.msra.mxu0 0.0
    %245 = vmatprep.subr.mxu0 0.0
    %246 = vmatpush1.msra.mxu0 0.0
    %247 = vmatprep.subr.mxu0 0.0
    %248 = vmatpush1.msra.mxu0 0.0
    %249 = vmatprep.subr.mxu0 0.0
    %250 = vmatpush1.msra.mxu0 0.0
    %251 = vmatprep.subr.mxu0 0.0
    %252 = vmatpush1.msra.mxu0 0.0
    %253 = vmatprep.subr.mxu0 0.0
    %254 = vmatpush1.msra.mxu0 0.0
    %255 = vmatprep.subr.mxu0 0.0
    %256 = vmatpush1.msra.mxu0 0.0
    %257 = vmatprep.subr.mxu0 0.0
    %258 = vmatpush1.msra.mxu0 0.0
    %259 = vmatprep.subr.mxu0 0.0
    %260 = vmatpush1.msra.mxu0 0.0
    %261 = vmatprep.subr.mxu0 0.0
    %262 = vmatpush1.msra.mxu0 0.0
    %263 = vmatprep.subr.mxu0 0.0
    %264 = vmatpush1.msra.mxu0 0.0
    %265 = vmatprep.subr.mxu0 0.0
    %266 = vmatpush1.msra.mxu0 0.0
    %267 = vmatprep.subr.mxu0 0.0
    %268 = vmatpush1.msra.mxu0 0.0
    %269 = vmatprep.subr.mxu0 0.0
    %270 = vmatpush1.msra.mxu0 0.0
    %271 = vmatprep.subr.mxu0 0.0
    %272 = vmatpush1.msra.mxu0 0.0
    %273 = vmatprep.subr.mxu0 0.0
    %274 = vmatpush1.msra.mxu0 0.0
    %275 = vmatprep.subr.mxu0 0.0
    %276 = vmatpush1.msra.mxu0 0.0
    %277 = vmatprep.subr.mxu0 0.0
    %278 = vmatpush1.msra.mxu0 0.0
    %279 = vmatprep.mubr.f32.mxu0 0.0
    %280 = vmatmul.mubr.f32.gmra.mrb[0].mxu0 %v213
    %v281 = vpop.f32.mrb[0].mxu0
    %v282 = vadd.f32 %v207, %v281
    %v283 = vpop.f32.mrb[0].mxu0
    %284 = vdwg.mxu0
    %vm285 = vcmask 9216
    %286 = vst.msk [vmem:[#allocation5] sm:$0x3] %vm285, %v282
    // Predicated region
    $region30: #{tpu_custom_call.1} parent=1 // pred_check
      _
    $region31: #{tpu_custom_call.1} parent=1 // pred_check_branch
      %288 = sbr.rel (0) target = $region33
    $region32: #{tpu_custom_call.1} parent=1 // pred_region
      %s290 = ssub.s32 32, 32
      %291 = vsyncadd [#allocation4], %s290
      %s293 = sshll.u32 [#allocation5], 4
      %s294 = int_to_ptr.vmem [resolvable:$true] %s293
      %296 = dma.vmem_to_hbm [thread:$0]  %s294, 32, %s6, [#allocation4]
    $region33: #{tpu_custom_call.1} parent=1 // pred_fallthru
      _
    // Predicated region
    $region34: #{tpu_custom_call.1} parent=1 // pred_check
      _
    $region35: #{tpu_custom_call.1} parent=1 // pred_check_branch
      %298 = sbr.rel (0) target = $region37
    $region36: #{tpu_custom_call.1} parent=1 // pred_region
      %299 = dma.done [#allocation4], 32
    $region37: #{tpu_custom_call.1} parent=1 // pred_fallthru
      _
    %300 = vsyncpa [#allocation3], 1
    %301 = vsyncpa [#allocation4], 1

</llo_original>
